<compile_context>
chip_gen: v7x
topology: tpu7x:2x2x1
jax: 0.10.0
libtpu: 0.0.40
codegen_flags: <defaults>
</compile_context>

<pallas_src>
import jax
import jax.numpy as jnp
from jax.experimental import pallas as pl
from jax.experimental.pallas import tpu as pltpu


def _round_up(a: int, b: int) -> int:
    return ((a + b - 1) // b) * b


def _round_down(a: int, b: int) -> int:
    return (a // b) * b


def _density_kernel(x_ref, mu_ref, inv_std_ref, o_ref):
    # x_ref       : (TN, D)      tile of samples
    # mu_ref      : (TM, D)      tile of component means
    # inv_std_ref : (TM, D)      tile of precomputed reciprocal stds
    # o_ref       : (TN, TM*D)   lane-dense flat output slab
    x = x_ref[...]                        # (TN, D), loaded once, reused per component
    tm, d = mu_ref.shape

    # Per-component slice stores: each statement touches one (TN, D) chunk so
    # intermediates stay vreg-sized (no output-sized temp, no extra vst+vld),
    # and each store is a full-width lane-aligned vst when D % 128 == 0.
    for mi in range(tm):                  # static unroll; tm bounded (<= 64) by wrapper
        mu_row = mu_ref[pl.ds(mi, 1), :]          # (1, D) -> sublane broadcast is free
        inv_row = inv_std_ref[pl.ds(mi, 1), :]    # (1, D)
        o_ref[:, pl.ds(mi * d, d)] = (x - mu_row) * inv_row


def density_loss_forward(x, mu, std, *, tile_n=None, tile_m=None):
    """Pallas forward for density_loss.

    x   : [N, D]   (samples)
    mu  : [M, D]   (component means)
    std : [M, D]   (component stds)
    returns [N, M, D] broadcasted normalized residuals
            (x[:, None, :] - mu[None, :, :]) / std[None, :, :]
    """
    N, D = x.shape
    M, D2 = mu.shape
    assert D == D2 and std.shape == (M, D)
    dtype = x.dtype
    itemsize = jnp.dtype(dtype).itemsize

    # ---- generation-aware VMEM budget -------------------------------------
    try:
        phys_vmem = int(pltpu.get_tpu_info().vmem_capacity_bytes)
    except Exception:  # fall back to the smallest current generation (v7x)
        phys_vmem = 64 << 20
    # Leave headroom below physical VMEM; cap at 96 MiB on v5e/v6e (128 MiB),
    # ~48 MiB on v7x (64 MiB).
    vmem_limit = int(min(max(phys_vmem - (16 << 20), 32 << 20), 96 << 20))

    # ---- tile_m: bound lane extent per block independently of M -----------
    if tile_m is None:
        row_bytes = M * D * itemsize
        max_row_bytes = 2 << 20          # <= 2 MiB of lanes per block row
        max_unroll = 64                  # static-unroll bound in the kernel
        if row_bytes <= max_row_bytes and M <= max_unroll:
            tile_m = M
        else:
            tile_m = max(8, _round_down(min(max_row_bytes // (D * itemsize),
                                            max_unroll), 8))
            # Block-shape legality / lane density: tile_m*D must be a multiple
            # of 128 unless the block spans the whole flattened M*D axis.
            if (tile_m * D) % 128 != 0:
                tile_m = M
    tile_m = int(min(tile_m, M))

    # ---- tile_n: target a multi-MiB output block per grid step ------------
    auto_tile_n = tile_n is None
    block_row_bytes = tile_m * D * itemsize
    if auto_tile_n:
        target_bytes = 8 << 20
        tile_n = max(8, min(2048, _round_down(max(target_bytes // block_row_bytes, 8), 8)))
    tile_n = max(8, _round_up(int(tile_n), 8))
    tile_n = min(tile_n, _round_up(N, 8))

    # Keep the double-buffered footprint inside the VMEM budget.
    def _footprint(tn):
        return 2 * (tn * tile_m * D + tn * D + 2 * tile_m * D) * itemsize

    while tile_n > 8 and _footprint(tile_n) > vmem_limit - (4 << 20):
        tile_n = max(8, _round_up(tile_n // 2, 8))
    if _footprint(tile_n) > vmem_limit:
        # TODO(synk): for pathologically large tile_m*D (D not a multiple of
        # 16 so M cannot be tiled) the minimum block does not fit VMEM.
        raise ValueError("density_loss_forward: minimum block exceeds VMEM budget")

    # v7x megacore: prefer an even number of grid steps so both TensorCores
    # get work (on v5e/v6e there is a single TC, so no constraint is applied).
    n_steps = -(-N // tile_n)
    m_steps = -(-M // tile_m)
    if auto_tile_n and phys_vmem <= (64 << 20) and (n_steps * m_steps) % 2 == 1 and n_steps > 1:
        n_steps += 1
        tile_n = max(8, _round_up(-(-N // n_steps), 8))

    # Precompute 1/std once on the host side (tiny M*D op) instead of a
    # reciprocal per grid step inside the kernel.  Note: (x-mu)*(1/std)
    # differs from (x-mu)/std by ~1 ULP per element.
    inv_std = (1.0 / std).astype(dtype)

    grid = (pl.cdiv(N, tile_n), pl.cdiv(M, tile_m))

    out_flat = pl.pallas_call(
        _density_kernel,
        out_shape=jax.ShapeDtypeStruct((N, M * D), dtype),
        grid_spec=pltpu.PrefetchScalarGridSpec(
            num_scalar_prefetch=0,
            grid=grid,
            in_specs=[
                pl.BlockSpec((tile_n, D), lambda i, j: (i, 0)),       # x tile
                pl.BlockSpec((tile_m, D), lambda i, j: (j, 0)),       # mu tile
                pl.BlockSpec((tile_m, D), lambda i, j: (j, 0)),       # 1/std tile
            ],
            out_specs=pl.BlockSpec((tile_n, tile_m * D), lambda i, j: (i, j)),
        ),
        compiler_params=pltpu.CompilerParams(
            dimension_semantics=("parallel", "parallel"),
            vmem_limit_bytes=vmem_limit,
        ),
    )(x, mu, inv_std)

    # Free metadata reshape: (N, M*D) is contiguous as (N, M, D).
    return out_flat.reshape(N, M, D)


def density_loss_ref(x, mu, std):
    # Pure-JAX reference of the same broadcast semantics.
    return (x[:, None, :] - mu[None, :, :]) / std[None, :, :]


if __name__ == "__main__":
    key = jax.random.PRNGKey(0)
    k1, k2, k3 = jax.random.split(key, 3)

    # Small demo shapes; N deliberately not a multiple of 8 to exercise the
    # masked partial-final-block path (no padding, no [:N] slice).
    N, M, D = 19, 8, 128
    x = jax.random.normal(k1, (N, D), dtype=jnp.float32)
    mu = jax.random.normal(k2, (M, D), dtype=jnp.float32)
    std = jax.random.uniform(k3, (M, D), dtype=jnp.float32,
                             minval=0.5, maxval=1.5)

    ref = density_loss_ref(x, mu, std)

    # Auto-tiled path (single grid step at this size).
    out = jax.block_until_ready(density_loss_forward(x, mu, std))
    assert out.shape == (N, M, D)
    assert jnp.allclose(out, ref, atol=1e-5, rtol=1e-5)

    # Forced-small tiles: multi-step grid with a masked partial final N block.
    out2 = jax.block_until_ready(density_loss_forward(x, mu, std, tile_n=8))
    assert jnp.allclose(out2, ref, atol=1e-5, rtol=1e-5)

    print("KERNEL_OK")
</pallas_src>

<mosaic_0001>
module attributes {stable_mosaic.version = 11 : i64} {
  func.func @_density_kernel(%arg0: i32, %arg1: i32, %arg2: memref<24x128xf32, #tpu.memory_space<vmem>>, %arg3: memref<8x128xf32, #tpu.memory_space<vmem>>, %arg4: memref<8x128xf32, #tpu.memory_space<vmem>>, %arg5: memref<24x1024xf32, #tpu.memory_space<vmem>>) attributes {dimension_semantics = [#tpu.dimension_semantics<parallel>, #tpu.dimension_semantics<parallel>], iteration_bounds = array<i64: 1, 1>, scalar_prefetch = 0 : i64, scratch_operands = 0 : i64, tpu.core_type = #tpu.core_type<tc>, window_params = [{transform_indices = @transform_0, window_bounds = array<i64: 24, 128>}, {transform_indices = @transform_1, window_bounds = array<i64: 8, 128>}, {transform_indices = @transform_2, window_bounds = array<i64: 8, 128>}, {transform_indices = @transform_3, window_bounds = array<i64: 24, 1024>}]} {
    %c0 = arith.constant 0 : index
    %c0_0 = arith.constant 0 : index
    %0 = vector.load %arg2[%c0, %c0_0] : memref<24x128xf32, #tpu.memory_space<vmem>>, vector<24x128xf32>
    %c0_1 = arith.constant 0 : index
    %c0_2 = arith.constant 0 : index
    %1 = vector.load %arg3[%c0_1, %c0_2] : memref<8x128xf32, #tpu.memory_space<vmem>>, vector<1x128xf32>
    %c0_3 = arith.constant 0 : index
    %c0_4 = arith.constant 0 : index
    %2 = vector.load %arg4[%c0_3, %c0_4] : memref<8x128xf32, #tpu.memory_space<vmem>>, vector<1x128xf32>
    %3 = vector.broadcast %1 : vector<1x128xf32> to vector<24x128xf32>
    %4 = arith.subf %0, %3 : vector<24x128xf32>
    %5 = vector.broadcast %2 : vector<1x128xf32> to vector<24x128xf32>
    %6 = arith.mulf %4, %5 : vector<24x128xf32>
    %c0_5 = arith.constant 0 : index
    %c0_6 = arith.constant 0 : index
    %7 = vector.load %arg5[%c0_5, %c0_6] : memref<24x1024xf32, #tpu.memory_space<vmem>>, vector<24x128xf32>
    tpu.vector_store %arg5[%c0_5, %c0_6], %6 {strides = array<i32>} : memref<24x1024xf32, #tpu.memory_space<vmem>>, vector<24x128xf32>,
    %c1 = arith.constant 1 : index
    %c0_7 = arith.constant 0 : index
    %8 = vector.load %arg3[%c1, %c0_7] : memref<8x128xf32, #tpu.memory_space<vmem>>, vector<1x128xf32>
    %c1_8 = arith.constant 1 : index
    %c0_9 = arith.constant 0 : index
    %9 = vector.load %arg4[%c1_8, %c0_9] : memref<8x128xf32, #tpu.memory_space<vmem>>, vector<1x128xf32>
    %10 = vector.broadcast %8 : vector<1x128xf32> to vector<24x128xf32>
    %11 = arith.subf %0, %10 : vector<24x128xf32>
    %12 = vector.broadcast %9 : vector<1x128xf32> to vector<24x128xf32>
    %13 = arith.mulf %11, %12 : vector<24x128xf32>
    %c0_10 = arith.constant 0 : index
    %c128 = arith.constant 128 : index
    %14 = vector.load %arg5[%c0_10, %c128] : memref<24x1024xf32, #tpu.memory_space<vmem>>, vector<24x128xf32>
    tpu.vector_store %arg5[%c0_10, %c128], %13 {strides = array<i32>} : memref<24x1024xf32, #tpu.memory_space<vmem>>, vector<24x128xf32>,
    %c2 = arith.constant 2 : index
    %c0_11 = arith.constant 0 : index
    %15 = vector.load %arg3[%c2, %c0_11] : memref<8x128xf32, #tpu.memory_space<vmem>>, vector<1x128xf32>
    %c2_12 = arith.constant 2 : index
    %c0_13 = arith.constant 0 : index
    %16 = vector.load %arg4[%c2_12, %c0_13] : memref<8x128xf32, #tpu.memory_space<vmem>>, vector<1x128xf32>
    %17 = vector.broadcast %15 : vector<1x128xf32> to vector<24x128xf32>
    %18 = arith.subf %0, %17 : vector<24x128xf32>
    %19 = vector.broadcast %16 : vector<1x128xf32> to vector<24x128xf32>
    %20 = arith.mulf %18, %19 : vector<24x128xf32>
    %c0_14 = arith.constant 0 : index
    %c256 = arith.constant 256 : index
    %21 = vector.load %arg5[%c0_14, %c256] : memref<24x1024xf32, #tpu.memory_space<vmem>>, vector<24x128xf32>
    tpu.vector_store %arg5[%c0_14, %c256], %20 {strides = array<i32>} : memref<24x1024xf32, #tpu.memory_space<vmem>>, vector<24x128xf32>,
    %c3 = arith.constant 3 : index
    %c0_15 = arith.constant 0 : index
    %22 = vector.load %arg3[%c3, %c0_15] : memref<8x128xf32, #tpu.memory_space<vmem>>, vector<1x128xf32>
    %c3_16 = arith.constant 3 : index
    %c0_17 = arith.constant 0 : index
    %23 = vector.load %arg4[%c3_16, %c0_17] : memref<8x128xf32, #tpu.memory_space<vmem>>, vector<1x128xf32>
    %24 = vector.broadcast %22 : vector<1x128xf32> to vector<24x128xf32>
    %25 = arith.subf %0, %24 : vector<24x128xf32>
    %26 = vector.broadcast %23 : vector<1x128xf32> to vector<24x128xf32>
    %27 = arith.mulf %25, %26 : vector<24x128xf32>
    %c0_18 = arith.constant 0 : index
    %c384 = arith.constant 384 : index
    %28 = vector.load %arg5[%c0_18, %c384] : memref<24x1024xf32, #tpu.memory_space<vmem>>, vector<24x128xf32>
    tpu.vector_store %arg5[%c0_18, %c384], %27 {strides = array<i32>} : memref<24x1024xf32, #tpu.memory_space<vmem>>, vector<24x128xf32>,
    %c4 = arith.constant 4 : index
    %c0_19 = arith.constant 0 : index
    %29 = vector.load %arg3[%c4, %c0_19] : memref<8x128xf32, #tpu.memory_space<vmem>>, vector<1x128xf32>
    %c4_20 = arith.constant 4 : index
    %c0_21 = arith.constant 0 : index
    %30 = vector.load %arg4[%c4_20, %c0_21] : memref<8x128xf32, #tpu.memory_space<vmem>>, vector<1x128xf32>
    %31 = vector.broadcast %29 : vector<1x128xf32> to vector<24x128xf32>
    %32 = arith.subf %0, %31 : vector<24x128xf32>
    %33 = vector.broadcast %30 : vector<1x128xf32> to vector<24x128xf32>
    %34 = arith.mulf %32, %33 : vector<24x128xf32>
    %c0_22 = arith.constant 0 : index
    %c512 = arith.constant 512 : index
    %35 = vector.load %arg5[%c0_22, %c512] : memref<24x1024xf32, #tpu.memory_space<vmem>>, vector<24x128xf32>
    tpu.vector_store %arg5[%c0_22, %c512], %34 {strides = array<i32>} : memref<24x1024xf32, #tpu.memory_space<vmem>>, vector<24x128xf32>,
    %c5 = arith.constant 5 : index
    %c0_23 = arith.constant 0 : index
    %36 = vector.load %arg3[%c5, %c0_23] : memref<8x128xf32, #tpu.memory_space<vmem>>, vector<1x128xf32>
    %c5_24 = arith.constant 5 : index
    %c0_25 = arith.constant 0 : index
    %37 = vector.load %arg4[%c5_24, %c0_25] : memref<8x128xf32, #tpu.memory_space<vmem>>, vector<1x128xf32>
    %38 = vector.broadcast %36 : vector<1x128xf32> to vector<24x128xf32>
    %39 = arith.subf %0, %38 : vector<24x128xf32>
    %40 = vector.broadcast %37 : vector<1x128xf32> to vector<24x128xf32>
    %41 = arith.mulf %39, %40 : vector<24x128xf32>
    %c0_26 = arith.constant 0 : index
    %c640 = arith.constant 640 : index
    %42 = vector.load %arg5[%c0_26, %c640] : memref<24x1024xf32, #tpu.memory_space<vmem>>, vector<24x128xf32>
    tpu.vector_store %arg5[%c0_26, %c640], %41 {strides = array<i32>} : memref<24x1024xf32, #tpu.memory_space<vmem>>, vector<24x128xf32>,
    %c6 = arith.constant 6 : index
    %c0_27 = arith.constant 0 : index
    %43 = vector.load %arg3[%c6, %c0_27] : memref<8x128xf32, #tpu.memory_space<vmem>>, vector<1x128xf32>
    %c6_28 = arith.constant 6 : index
    %c0_29 = arith.constant 0 : index
    %44 = vector.load %arg4[%c6_28, %c0_29] : memref<8x128xf32, #tpu.memory_space<vmem>>, vector<1x128xf32>
    %45 = vector.broadcast %43 : vector<1x128xf32> to vector<24x128xf32>
    %46 = arith.subf %0, %45 : vector<24x128xf32>
    %47 = vector.broadcast %44 : vector<1x128xf32> to vector<24x128xf32>
    %48 = arith.mulf %46, %47 : vector<24x128xf32>
    %c0_30 = arith.constant 0 : index
    %c768 = arith.constant 768 : index
    %49 = vector.load %arg5[%c0_30, %c768] : memref<24x1024xf32, #tpu.memory_space<vmem>>, vector<24x128xf32>
    tpu.vector_store %arg5[%c0_30, %c768], %48 {strides = array<i32>} : memref<24x1024xf32, #tpu.memory_space<vmem>>, vector<24x128xf32>,
    %c7 = arith.constant 7 : index
    %c0_31 = arith.constant 0 : index
    %50 = vector.load %arg3[%c7, %c0_31] : memref<8x128xf32, #tpu.memory_space<vmem>>, vector<1x128xf32>
    %c7_32 = arith.constant 7 : index
    %c0_33 = arith.constant 0 : index
    %51 = vector.load %arg4[%c7_32, %c0_33] : memref<8x128xf32, #tpu.memory_space<vmem>>, vector<1x128xf32>
    %52 = vector.broadcast %50 : vector<1x128xf32> to vector<24x128xf32>
    %53 = arith.subf %0, %52 : vector<24x128xf32>
    %54 = vector.broadcast %51 : vector<1x128xf32> to vector<24x128xf32>
    %55 = arith.mulf %53, %54 : vector<24x128xf32>
    %c0_34 = arith.constant 0 : index
    %c896 = arith.constant 896 : index
    %56 = vector.load %arg5[%c0_34, %c896] : memref<24x1024xf32, #tpu.memory_space<vmem>>, vector<24x128xf32>
    tpu.vector_store %arg5[%c0_34, %c896], %55 {strides = array<i32>} : memref<24x1024xf32, #tpu.memory_space<vmem>>, vector<24x128xf32>,
    return
  }
  func.func @transform_0(%arg0: i32, %arg1: i32) -> (i32, i32) {
    %c0_i32 = arith.constant 0 : i32
    %c0_i32_0 = arith.constant 0 : i32
    return %arg0, %c0_i32 : i32, i32
  }
  func.func @transform_1(%arg0: i32, %arg1: i32) -> (i32, i32) {
    %c0_i32 = arith.constant 0 : i32
    %c0_i32_0 = arith.constant 0 : i32
    return %arg1, %c0_i32 : i32, i32
  }
  func.func @transform_2(%arg0: i32, %arg1: i32) -> (i32, i32) {
    %c0_i32 = arith.constant 0 : i32
    %c0_i32_0 = arith.constant 0 : i32
    return %arg1, %c0_i32 : i32, i32
  }
  func.func @transform_3(%arg0: i32, %arg1: i32) -> (i32, i32) {
    %c0_i32 = arith.constant 0 : i32
    return %arg0, %arg1 : i32, i32
  }
}

</mosaic_0001>

<llo_original>
// kernel: tpu_custom_call.1
$region0: #{tpu_custom_call.1}
  #allocation0 [shape = 'u32[]', space=smem, size = 0x4, offset = 0x4, fixed_abs, tag = 'smem constant byte address 0x4 - core index']
  #allocation1 [shape = 'u32[144,128]{1,0:T(1,128)}', space=vmem, size = 0x12000, scoped, tag = 'internal scratch']
  %s0 = inlined_call_operand.hbm [shape: f32[19,128], index: 0, kind: input, shape index: {}]
  %s1 = inlined_call_operand.hbm [shape: f32[8,128], index: 1, kind: input, shape index: {}]
  %s2 = inlined_call_operand.hbm [shape: f32[8,128], index: 2, kind: input, shape index: {}]
  %s3 = inlined_call_operand.hbm [shape: f32[19,1024], index: 3, kind: output, shape index: {}]
  %s4 = sld [smem:[#allocation0]]
  $region34: #{tpu_custom_call.1} parent=0
    _
  %s6 = ssub.s32 1, %s4
  %s7 = scalar_select 0, %s6, %s4
  $region1: #{tpu_custom_call.1} parent=0
    #allocation2 [shape = 'u8[12288]{0}', space=vmem, size = 0x3000, scoped, tag = 'input window, operand 0, single buffered']
    #allocation3 [shape = 's32[1]{0}', space=sflag, size = 0x4, scoped, tag = 'scoped memory for tpu_custom_call.1']
    #allocation4 [shape = 's32[1]{0}', space=sflag, size = 0x4, scoped, tag = 'scoped memory for tpu_custom_call.1']
    #allocation5 [shape = 'u8[4096]{0}', space=vmem, size = 0x1000, scoped, tag = 'input window, operand 1, single buffered']
    #allocation6 [shape = 's32[1]{0}', space=sflag, size = 0x4, scoped, tag = 'scoped memory for tpu_custom_call.1']
    #allocation7 [shape = 'u8[4096]{0}', space=vmem, size = 0x1000, scoped, tag = 'input window, operand 2, single buffered']
    #allocation8 [shape = 'u8[98304]{0}', space=vmem, size = 0x18000, scoped, tag = 'output window, operand 0, single buffered']
    %8 = vsyncpa [#allocation3], 0
    %9 = vsyncpa [#allocation6], 0
    %10 = vsyncpa [#allocation4], 0
    // Predicated region
    $region2: #{tpu_custom_call.1} parent=1 // pred_check
      _
    $region3: #{tpu_custom_call.1} parent=1 // pred_check_branch
      %12 = sbr.rel (0) target = $region5
    $region4: #{tpu_custom_call.1} parent=1 // pred_region
      %s14 = ssub.s32 384, 384
      %15 = vsyncadd [#allocation3], %s14
      %s16 = sshll.u32 [#allocation2], 4
      %s17 = int_to_ptr.vmem [resolvable:$true] %s16
      %22 = dma.hbm_to_vmem [thread:$0]  %s0, 384, %s17, [#allocation3], 128, 128, 8
    $region5: #{tpu_custom_call.1} parent=1 // pred_fallthru
      _
    // Predicated region
    $region6: #{tpu_custom_call.1} parent=1 // pred_check
      _
    $region7: #{tpu_custom_call.1} parent=1 // pred_check_branch
      %24 = sbr.rel (0) target = $region9
    $region8: #{tpu_custom_call.1} parent=1 // pred_region
      %s26 = ssub.s32 128, 128
      %27 = vsyncadd [#allocation6], %s26
      %s29 = sshll.u32 [#allocation5], 4
      %s30 = int_to_ptr.vmem [resolvable:$true] %s29
      %32 = dma.hbm_to_vmem [thread:$0]  %s1, 128, %s30, [#allocation6]
    $region9: #{tpu_custom_call.1} parent=1 // pred_fallthru
      _
    // Predicated region
    $region10: #{tpu_custom_call.1} parent=1 // pred_check
      _
    $region11: #{tpu_custom_call.1} parent=1 // pred_check_branch
      %34 = sbr.rel (0) target = $region13
    $region12: #{tpu_custom_call.1} parent=1 // pred_region
      %s36 = ssub.s32 128, 128
      %37 = vsyncadd [#allocation6], %s36
      %s39 = sshll.u32 [#allocation7], 4
      %s40 = int_to_ptr.vmem [resolvable:$true] %s39
      %42 = dma.hbm_to_vmem [thread:$0]  %s2, 128, %s40, [#allocation6]
    $region13: #{tpu_custom_call.1} parent=1 // pred_fallthru
      _
    // Predicated region
    $region14: #{tpu_custom_call.1} parent=1 // pred_check
      _
    $region15: #{tpu_custom_call.1} parent=1 // pred_check_branch
      %44 = sbr.rel (0) target = $region17
    $region16: #{tpu_custom_call.1} parent=1 // pred_region
      %45 = dma.done [#allocation3], 384
    $region17: #{tpu_custom_call.1} parent=1 // pred_fallthru
      _
    // Predicated region
    $region18: #{tpu_custom_call.1} parent=1 // pred_check
      _
    $region19: #{tpu_custom_call.1} parent=1 // pred_check_branch
      %47 = sbr.rel (0) target = $region21
    $region20: #{tpu_custom_call.1} parent=1 // pred_region
      %48 = dma.done [#allocation6], 128
    $region21: #{tpu_custom_call.1} parent=1 // pred_fallthru
      _
    // Predicated region
    $region22: #{tpu_custom_call.1} parent=1 // pred_check
      _
    $region23: #{tpu_custom_call.1} parent=1 // pred_check_branch
      %50 = sbr.rel (0) target = $region25
    $region24: #{tpu_custom_call.1} parent=1 // pred_region
      %51 = dma.done [#allocation6], 128
    $region25: #{tpu_custom_call.1} parent=1 // pred_fallthru
      _
    %v52 = vld [vmem:[#allocation2] sm:$0xff]
    %v53 = vld [vmem:[#allocation2 + $0x8] sm:$0xff]
    %v54 = vld [vmem:[#allocation2 + $0x10] sm:$0xff]
    %v55 = vld [vmem:[#allocation5] sm:$0x1]
    %v56 = vld [vmem:[#allocation7] sm:$0x1]
    %v57 = vlaneseq
    %v58 = vshrl.u32 %v57, 7
    %v59 = vsub.s32 0, %v58
    %v60 = vrot.slane %v55, %v59
    %v61 = vsub.f32 %v52, %v60
    %v62 = vsub.f32 %v53, %v60
    %v63 = vsub.f32 %v54, %v60
    %v64 = vlaneseq
    %v65 = vshrl.u32 %v64, 7
    %v66 = vsub.s32 0, %v65
    %v67 = vrot.slane %v56, %v66
    %v68 = vmul.f32 %v61, %v67
    %v69 = vmul.f32 %v62, %v67
    %v70 = vmul.f32 %v63, %v67
    %71 = vst [vmem:[#allocation8] sm:$0xff] %v68
    %72 = vst [vmem:[#allocation8 + $0x40] sm:$0xff] %v69
    %73 = vst [vmem:[#allocation8 + $0x80] sm:$0xff] %v70
    %v74 = vld [vmem:[#allocation5 + $0x1] sm:$0x1]
    %v75 = vld [vmem:[#allocation7 + $0x1] sm:$0x1]
    %v76 = vlaneseq
    %v77 = vshrl.u32 %v76, 7
    %v78 = vsub.s32 0, %v77
    %v79 = vrot.slane %v74, %v78
    %v80 = vsub.f32 %v52, %v79
    %v81 = vsub.f32 %v53, %v79
    %v82 = vsub.f32 %v54, %v79
    %v83 = vlaneseq
    %v84 = vshrl.u32 %v83, 7
    %v85 = vsub.s32 0, %v84
    %v86 = vrot.slane %v75, %v85
    %v87 = vmul.f32 %v80, %v86
    %v88 = vmul.f32 %v81, %v86
    %v89 = vmul.f32 %v82, %v86
    %90 = vst [vmem:[#allocation8 + $0x8] sm:$0xff] %v87
    %91 = vst [vmem:[#allocation8 + $0x48] sm:$0xff] %v88
    %92 = vst [vmem:[#allocation8 + $0x88] sm:$0xff] %v89
    %v93 = vld [vmem:[#allocation5 + $0x2] sm:$0x1]
    %v94 = vld [vmem:[#allocation7 + $0x2] sm:$0x1]
    %v95 = vlaneseq
    %v96 = vshrl.u32 %v95, 7
    %v97 = vsub.s32 0, %v96
    %v98 = vrot.slane %v93, %v97
    %v99 = vsub.f32 %v52, %v98
    %v100 = vsub.f32 %v53, %v98
    %v101 = vsub.f32 %v54, %v98
    %v102 = vlaneseq
    %v103 = vshrl.u32 %v102, 7
    %v104 = vsub.s32 0, %v103
    %v105 = vrot.slane %v94, %v104
    %v106 = vmul.f32 %v99, %v105
    %v107 = vmul.f32 %v100, %v105
    %v108 = vmul.f32 %v101, %v105
    %109 = vst [vmem:[#allocation8 + $0x10] sm:$0xff] %v106
    %110 = vst [vmem:[#allocation8 + $0x50] sm:$0xff] %v107
    %111 = vst [vmem:[#allocation8 + $0x90] sm:$0xff] %v108
    %v112 = vld [vmem:[#allocation5 + $0x3] sm:$0x1]
    %v113 = vld [vmem:[#allocation7 + $0x3] sm:$0x1]
    %v114 = vlaneseq
    %v115 = vshrl.u32 %v114, 7
    %v116 = vsub.s32 0, %v115
    %v117 = vrot.slane %v112, %v116
    %v118 = vsub.f32 %v52, %v117
    %v119 = vsub.f32 %v53, %v117
    %v120 = vsub.f32 %v54, %v117
    %v121 = vlaneseq
    %v122 = vshrl.u32 %v121, 7
    %v123 = vsub.s32 0, %v122
    %v124 = vrot.slane %v113, %v123
    %v125 = vmul.f32 %v118, %v124
    %v126 = vmul.f32 %v119, %v124
    %v127 = vmul.f32 %v120, %v124
    %128 = vst [vmem:[#allocation8 + $0x18] sm:$0xff] %v125
    %129 = vst [vmem:[#allocation8 + $0x58] sm:$0xff] %v126
    %130 = vst [vmem:[#allocation8 + $0x98] sm:$0xff] %v127
    %v131 = vld [vmem:[#allocation5 + $0x4] sm:$0x1]
    %v132 = vld [vmem:[#allocation7 + $0x4] sm:$0x1]
    %v133 = vlaneseq
    %v134 = vshrl.u32 %v133, 7
    %v135 = vsub.s32 0, %v134
    %v136 = vrot.slane %v131, %v135
    %v137 = vsub.f32 %v52, %v136
    %v138 = vsub.f32 %v53, %v136
    %v139 = vsub.f32 %v54, %v136
    %v140 = vlaneseq
    %v141 = vshrl.u32 %v140, 7
    %v142 = vsub.s32 0, %v141
    %v143 = vrot.slane %v132, %v142
    %v144 = vmul.f32 %v137, %v143
    %v145 = vmul.f32 %v138, %v143
    %v146 = vmul.f32 %v139, %v143
    %147 = vst [vmem:[#allocation8 + $0x20] sm:$0xff] %v144
    %148 = vst [vmem:[#allocation8 + $0x60] sm:$0xff] %v145
    %149 = vst [vmem:[#allocation8 + $0xa0] sm:$0xff] %v146
    %v150 = vld [vmem:[#allocation5 + $0x5] sm:$0x1]
    %v151 = vld [vmem:[#allocation7 + $0x5] sm:$0x1]
    %v152 = vlaneseq
    %v153 = vshrl.u32 %v152, 7
    %v154 = vsub.s32 0, %v153
    %v155 = vrot.slane %v150, %v154
    %v156 = vsub.f32 %v52, %v155
    %v157 = vsub.f32 %v53, %v155
    %v158 = vsub.f32 %v54, %v155
    %v159 = vlaneseq
    %v160 = vshrl.u32 %v159, 7
    %v161 = vsub.s32 0, %v160
    %v162 = vrot.slane %v151, %v161
    %v163 = vmul.f32 %v156, %v162
    %v164 = vmul.f32 %v157, %v162
    %v165 = vmul.f32 %v158, %v162
    %166 = vst [vmem:[#allocation8 + $0x28] sm:$0xff] %v163
    %167 = vst [vmem:[#allocation8 + $0x68] sm:$0xff] %v164
    %168 = vst [vmem:[#allocation8 + $0xa8] sm:$0xff] %v165
    %v169 = vld [vmem:[#allocation5 + $0x6] sm:$0x1]
    %v170 = vld [vmem:[#allocation7 + $0x6] sm:$0x1]
    %v171 = vlaneseq
    %v172 = vshrl.u32 %v171, 7
    %v173 = vsub.s32 0, %v172
    %v174 = vrot.slane %v169, %v173
    %v175 = vsub.f32 %v52, %v174
    %v176 = vsub.f32 %v53, %v174
    %v177 = vsub.f32 %v54, %v174
    %v178 = vlaneseq
    %v179 = vshrl.u32 %v178, 7
    %v180 = vsub.s32 0, %v179
    %v181 = vrot.slane %v170, %v180
    %v182 = vmul.f32 %v175, %v181
    %v183 = vmul.f32 %v176, %v181
    %v184 = vmul.f32 %v177, %v181
    %185 = vst [vmem:[#allocation8 + $0x30] sm:$0xff] %v182
    %186 = vst [vmem:[#allocation8 + $0x70] sm:$0xff] %v183
    %187 = vst [vmem:[#allocation8 + $0xb0] sm:$0xff] %v184
    %v188 = vld [vmem:[#allocation5 + $0x7] sm:$0x1]
    %v189 = vld [vmem:[#allocation7 + $0x7] sm:$0x1]
    %v190 = vlaneseq
    %v191 = vshrl.u32 %v190, 7
    %v192 = vsub.s32 0, %v191
    %v193 = vrot.slane %v188, %v192
    %v194 = vsub.f32 %v52, %v193
    %v195 = vsub.f32 %v53, %v193
    %v196 = vsub.f32 %v54, %v193
    %v197 = vlaneseq
    %v198 = vshrl.u32 %v197, 7
    %v199 = vsub.s32 0, %v198
    %v200 = vrot.slane %v189, %v199
    %v201 = vmul.f32 %v194, %v200
    %v202 = vmul.f32 %v195, %v200
    %v203 = vmul.f32 %v196, %v200
    %204 = vst [vmem:[#allocation8 + $0x38] sm:$0xff] %v201
    %205 = vst [vmem:[#allocation8 + $0x78] sm:$0xff] %v202
    %206 = vst [vmem:[#allocation8 + $0xb8] sm:$0xff] %v203
    // Predicated region
    $region26: #{tpu_custom_call.1} parent=1 // pred_check
      _
    $region27: #{tpu_custom_call.1} parent=1 // pred_check_branch
      %208 = sbr.rel (0) target = $region29
    $region28: #{tpu_custom_call.1} parent=1 // pred_region
      %s210 = ssub.s32 3072, 3072
      %211 = vsyncadd [#allocation4], %s210
      %s212 = sshll.u32 [#allocation8], 4
      %s213 = int_to_ptr.vmem [resolvable:$true] %s212
      %218 = dma.vmem_to_hbm [thread:$0]  %s213, 3072, %s3, [#allocation4], 1024, 1024, 64
    $region29: #{tpu_custom_call.1} parent=1 // pred_fallthru
      _
    // Predicated region
    $region30: #{tpu_custom_call.1} parent=1 // pred_check
      _
    $region31: #{tpu_custom_call.1} parent=1 // pred_check_branch
      %220 = sbr.rel (0) target = $region33
    $region32: #{tpu_custom_call.1} parent=1 // pred_region
      %221 = dma.done [#allocation4], 3072
    $region33: #{tpu_custom_call.1} parent=1 // pred_fallthru
      _
    %222 = vsyncpa [#allocation3], 1
    %223 = vsyncpa [#allocation6], 1
    %224 = vsyncpa [#allocation4], 1

</llo_original>
